<compile_context>
chip_gen: v7x
topology: tpu7x:2x2x1
jax: 0.10.0
libtpu: 0.0.40
codegen_flags: <defaults>
</compile_context>

<pallas_src>
import functools

import jax
import jax.numpy as jnp
import numpy as np
from jax import lax
from jax.experimental import pallas as pl
from jax.experimental.pallas import tpu as pltpu

SUBLANE = 8
LANE = 128


def _round_up(x, m):
    return (x + m - 1) // m * m


def decoder_rnn_kernel(x_ref, h0_ref, wih_ref, whh_ref, b_ref,
                       wout_ref, bout_ref, out_ref, xproj_ref, h_all_ref):
    """Whole decoder in one invocation (everything VMEM-resident).

    x_ref    : ((T+1)*Bp, Ip)  embeddings, time-major, batch padded to 8
    h0_ref   : (Bp, Hp)        initial hidden = encoder_hidden[0], padded
    wih_ref  : (Ip, Hp)        W_ih^T  (zero-padded)
    whh_ref  : (Hp, Hp)        W_hh^T  (zero-padded)
    b_ref    : (1, Hp)         b_ih + b_hh (zero-padded)
    wout_ref : (Hp, V)         W_out^T (zero-padded rows)
    bout_ref : (1, V)          b_out
    out_ref  : ((T+1)*Bp, V)   logits, time-major
    xproj_ref, h_all_ref : ((T+1)*Bp, Hp) f32 VMEM scratch
    """
    bp = h0_ref.shape[0]
    n_steps = x_ref.shape[0] // bp

    # Batched (hoisted) input projection for every time step at once:
    #   xproj[t] = relu(emb(token_t)) @ W_ih^T + (b_ih + b_hh)
    x = jnp.maximum(x_ref[...], 0.0)
    xproj_ref[...] = (
        jnp.dot(x, wih_ref[...], preferred_element_type=jnp.float32)
        + b_ref[...]
    )

    whh = whh_ref[...]

    # Serial recurrence: only the tiny h @ W_hh^T + tanh stays in the loop.
    def step(t, h):
        row = pl.multiple_of(t * bp, bp)
        h_new = jnp.tanh(
            xproj_ref[pl.ds(row, bp), :]
            + jnp.dot(h, whh, preferred_element_type=jnp.float32)
        )
        h_all_ref[pl.ds(row, bp), :] = h_new
        return h_new

    lax.fori_loop(0, n_steps, step, h0_ref[...], unroll=True)

    # Batched (hoisted) output projection: logits = h @ W_out^T + b_out
    out_ref[...] = (
        jnp.dot(h_all_ref[...], wout_ref[...], preferred_element_type=jnp.float32)
        + bout_ref[...]
    ).astype(out_ref.dtype)


def decoder_rnn_forward(encoder_hidden, target_tensor, kernel_params,
                        sos_token, max_length):
    """Teacher-forcing forward of DecoderRNN.

    encoder_hidden : (1, B, H) float32
    target_tensor  : (B, max_length) int32
    returns (decoder_outputs [B, max_length+1, V], generated_tokens [B, 1])
    """
    emb_pad, w_ih_t, w_hh_t, b_rnn, w_out_t, b_out = kernel_params
    B, T = target_tensor.shape
    assert T == max_length
    Ip = w_ih_t.shape[0]
    Hp = w_hh_t.shape[0]
    V = w_out_t.shape[1]
    Bp = _round_up(B, SUBLANE)
    n_steps = T + 1

    # Token sequence fed to forward_step: [sos, target[:,0], ..., target[:,T-1]]
    sos_ids = jnp.full((B, 1), sos_token, dtype=jnp.int32)
    input_ids = jnp.concatenate([sos_ids, target_tensor.astype(jnp.int32)], axis=1)

    # TODO(synk): Word2Vec module is not shown; modeled as a plain embedding lookup.
    x_seq = emb_pad[input_ids].astype(jnp.float32)               # (B, T+1, Ip)
    x_seq = jnp.transpose(x_seq, (1, 0, 2))                      # (T+1, B, Ip)
    x_seq = jnp.pad(x_seq, ((0, 0), (0, Bp - B), (0, 0)))        # (T+1, Bp, Ip)
    x_all = x_seq.reshape(n_steps * Bp, Ip)                      # ((T+1)*Bp, Ip)

    h0 = encoder_hidden[0].astype(jnp.float32)                   # (B, H)
    h0 = jnp.pad(h0, ((0, Bp - B), (0, Hp - h0.shape[1])))       # (Bp, Hp)

    vmem_spec = pl.BlockSpec(memory_space=pltpu.MemorySpace.VMEM)
    logits = pl.pallas_call(
        decoder_rnn_kernel,
        out_shape=jax.ShapeDtypeStruct((n_steps * Bp, V), jnp.float32),
        in_specs=[vmem_spec] * 7,
        out_specs=vmem_spec,
        scratch_shapes=[
            pltpu.VMEM((n_steps * Bp, Hp), jnp.float32),   # xproj (input proj)
            pltpu.VMEM((n_steps * Bp, Hp), jnp.float32),   # h for every step
        ],
    )(x_all, h0, w_ih_t, w_hh_t, b_rnn, w_out_t, b_out)

    logits = logits.reshape(n_steps, Bp, V)[:, :B, :]            # drop batch pad
    decoder_outputs = jnp.transpose(logits, (1, 0, 2))           # (B, T+1, V)

    # TODO(synk): the sampling branch (torch.multinomial with a torch Generator)
    # is not reproducible in JAX; only the teacher-forcing path is implemented,
    # so generated_tokens stays the initial SOS column.
    generated_tokens = sos_ids
    return decoder_outputs, generated_tokens


def init_raw_params(key, vocab_size, input_size, hidden_size):
    ks = jax.random.split(key, 7)
    emb = jax.random.normal(ks[0], (vocab_size, input_size), jnp.float32) * 0.1
    w_ih = jax.random.normal(ks[1], (hidden_size, input_size), jnp.float32) * 0.1
    w_hh = jax.random.normal(ks[2], (hidden_size, hidden_size), jnp.float32) * 0.1
    b_ih = jax.random.normal(ks[3], (hidden_size,), jnp.float32) * 0.1
    b_hh = jax.random.normal(ks[4], (hidden_size,), jnp.float32) * 0.1
    w_out = jax.random.normal(ks[5], (vocab_size, hidden_size), jnp.float32) * 0.1
    b_out = jax.random.normal(ks[6], (vocab_size,), jnp.float32) * 0.1
    return emb, w_ih, w_hh, b_ih, b_hh, w_out, b_out


def prepare_kernel_params(raw_params):
    """Transpose / combine / zero-pad raw params to (8,128)-friendly layouts."""
    emb, w_ih, w_hh, b_ih, b_hh, w_out, b_out = raw_params
    I = emb.shape[1]
    H = w_hh.shape[0]
    Ip = _round_up(I, LANE)
    Hp = _round_up(H, LANE)

    emb_pad = jnp.pad(emb, ((0, 0), (0, Ip - I)))                 # (V, Ip)
    w_ih_t = jnp.pad(w_ih.T, ((0, Ip - I), (0, Hp - H)))          # (Ip, Hp)
    w_hh_t = jnp.pad(w_hh.T, ((0, Hp - H), (0, Hp - H)))          # (Hp, Hp)
    b_rnn = jnp.pad(b_ih + b_hh, (0, Hp - H))[None, :]            # (1, Hp)
    w_out_t = jnp.pad(w_out.T, ((0, Hp - H), (0, 0)))             # (Hp, V)
    return emb_pad, w_ih_t, w_hh_t, b_rnn, w_out_t, b_out[None, :]


def reference_forward(encoder_hidden, target_tensor, raw_params, sos_token, max_length):
    emb, w_ih, w_hh, b_ih, b_hh, w_out, b_out = raw_params
    B = target_tensor.shape[0]
    sos_ids = jnp.full((B, 1), sos_token, dtype=jnp.int32)
    input_ids = jnp.concatenate([sos_ids, target_tensor], axis=1)
    h = encoder_hidden[0]
    outs = []
    for t in range(max_length + 1):
        x = jnp.maximum(emb[input_ids[:, t]], 0.0)
        h = jnp.tanh(x @ w_ih.T + b_ih + h @ w_hh.T + b_hh)
        outs.append(h @ w_out.T + b_out)
    return jnp.stack(outs, axis=1)


if __name__ == "__main__":
    vocab_size = 128
    input_size = 32
    hidden_size = 32
    sos_token = 1
    max_length = 8
    B = 2

    key = jax.random.PRNGKey(0)
    kp, kh, kt = jax.random.split(key, 3)

    raw_params = init_raw_params(kp, vocab_size, input_size, hidden_size)
    kernel_params = prepare_kernel_params(raw_params)

    encoder_hidden = jax.random.normal(kh, (1, B, hidden_size), jnp.float32)
    target_tensor = jax.random.randint(kt, (B, max_length), 0, vocab_size, jnp.int32)

    fwd = jax.jit(functools.partial(decoder_rnn_forward,
                                    sos_token=sos_token, max_length=max_length))
    decoder_outputs, generated_tokens = fwd(encoder_hidden, target_tensor, kernel_params)
    decoder_outputs = jax.block_until_ready(decoder_outputs)
    generated_tokens = jax.block_until_ready(generated_tokens)

    ref = reference_forward(encoder_hidden, target_tensor, raw_params,
                            sos_token, max_length)
    np.testing.assert_allclose(np.asarray(decoder_outputs), np.asarray(ref),
                               rtol=1e-5, atol=1e-5)
    assert decoder_outputs.shape == (B, max_length + 1, vocab_size)
    assert generated_tokens.shape == (B, 1)

    print("KERNEL_OK")
</pallas_src>

<mosaic_0001>
module attributes {stable_mosaic.version = 11 : i64} {
  func.func @decoder_rnn_kernel(%arg0: memref<72x128xf32, #tpu.memory_space<vmem>>, %arg1: memref<8x128xf32, #tpu.memory_space<vmem>>, %arg2: memref<128x128xf32, #tpu.memory_space<vmem>>, %arg3: memref<128x128xf32, #tpu.memory_space<vmem>>, %arg4: memref<1x128xf32, #tpu.memory_space<vmem>>, %arg5: memref<128x128xf32, #tpu.memory_space<vmem>>, %arg6: memref<1x128xf32, #tpu.memory_space<vmem>>, %arg7: memref<72x128xf32, #tpu.memory_space<vmem>>, %arg8: memref<72x128xf32, #tpu.memory_space<vmem>>, %arg9: memref<72x128xf32, #tpu.memory_space<vmem>>) attributes {dimension_semantics = [], scalar_prefetch = 0 : i64, scratch_operands = 2 : i64, tpu.core_type = #tpu.core_type<tc>} {
    %c0 = arith.constant 0 : index
    %c0_0 = arith.constant 0 : index
    %0 = vector.load %arg0[%c0, %c0_0] : memref<72x128xf32, #tpu.memory_space<vmem>>, vector<72x128xf32>
    %cst = arith.constant 0.000000e+00 : f32
    %1 = vector.broadcast %cst : f32 to vector<72x128xf32>
    %2 = arith.maximumf %0, %1 : vector<72x128xf32>
    %c0_1 = arith.constant 0 : index
    %c0_2 = arith.constant 0 : index
    %3 = vector.load %arg2[%c0_1, %c0_2] : memref<128x128xf32, #tpu.memory_space<vmem>>, vector<128x128xf32>
    %cst_3 = arith.constant dense<0.000000e+00> : vector<72x128xf32>
    %4 = tpu.matmul %2, %3, %cst_3 {dimension_numbers = #tpu.dot_dimension_numbers<[1], [0], [0], [1], [0, 0, 1, 1], [], []>} : vector<72x128xf32>, vector<128x128xf32>, vector<72x128xf32> -> vector<72x128xf32>
    %c0_4 = arith.constant 0 : index
    %c0_5 = arith.constant 0 : index
    %5 = vector.load %arg4[%c0_4, %c0_5] : memref<1x128xf32, #tpu.memory_space<vmem>>, vector<1x128xf32>
    %6 = vector.broadcast %5 : vector<1x128xf32> to vector<72x128xf32>
    %7 = arith.addf %4, %6 : vector<72x128xf32>
    %c0_6 = arith.constant 0 : index
    %c0_7 = arith.constant 0 : index
    %8 = vector.load %arg8[%c0_6, %c0_7] : memref<72x128xf32, #tpu.memory_space<vmem>>, vector<72x128xf32>
    tpu.vector_store %arg8[%c0_6, %c0_7], %7 {strides = array<i32>} : memref<72x128xf32, #tpu.memory_space<vmem>>, vector<72x128xf32>,
    %c0_8 = arith.constant 0 : index
    %c0_9 = arith.constant 0 : index
    %9 = vector.load %arg3[%c0_8, %c0_9] : memref<128x128xf32, #tpu.memory_space<vmem>>, vector<128x128xf32>
    %c0_10 = arith.constant 0 : index
    %c0_11 = arith.constant 0 : index
    %10 = vector.load %arg1[%c0_10, %c0_11] : memref<8x128xf32, #tpu.memory_space<vmem>>, vector<8x128xf32>
    %c0_i32 = arith.constant 0 : i32
    %c8_i32 = arith.constant 8 : i32
    %11 = arith.muli %c0_i32, %c8_i32 : i32
    %12 = tpu.assume_multiple %11, 8 : i32
    %13 = arith.index_cast %12 : i32 to index
    %c0_12 = arith.constant 0 : index
    %14 = vector.load %arg8[%13, %c0_12] : memref<72x128xf32, #tpu.memory_space<vmem>>, vector<8x128xf32>
    %cst_13 = arith.constant dense<0.000000e+00> : vector<8x128xf32>
    %15 = tpu.matmul %10, %9, %cst_13 {dimension_numbers = #tpu.dot_dimension_numbers<[1], [0], [0], [1], [0, 0, 1, 1], [], []>} : vector<8x128xf32>, vector<128x128xf32>, vector<8x128xf32> -> vector<8x128xf32>
    %16 = arith.addf %14, %15 : vector<8x128xf32>
    %17 = math.tanh %16 : vector<8x128xf32>
    %18 = arith.index_cast %12 : i32 to index
    %c0_14 = arith.constant 0 : index
    %19 = vector.load %arg9[%18, %c0_14] : memref<72x128xf32, #tpu.memory_space<vmem>>, vector<8x128xf32>
    tpu.vector_store %arg9[%18, %c0_14], %17 {strides = array<i32>} : memref<72x128xf32, #tpu.memory_space<vmem>>, vector<8x128xf32>,
    %c1_i32 = arith.constant 1 : i32
    %c8_i32_15 = arith.constant 8 : i32
    %20 = arith.muli %c1_i32, %c8_i32_15 : i32
    %21 = tpu.assume_multiple %20, 8 : i32
    %22 = arith.index_cast %21 : i32 to index
    %c0_16 = arith.constant 0 : index
    %23 = vector.load %arg8[%22, %c0_16] : memref<72x128xf32, #tpu.memory_space<vmem>>, vector<8x128xf32>
    %cst_17 = arith.constant dense<0.000000e+00> : vector<8x128xf32>
    %24 = tpu.matmul %17, %9, %cst_17 {dimension_numbers = #tpu.dot_dimension_numbers<[1], [0], [0], [1], [0, 0, 1, 1], [], []>} : vector<8x128xf32>, vector<128x128xf32>, vector<8x128xf32> -> vector<8x128xf32>
    %25 = arith.addf %23, %24 : vector<8x128xf32>
    %26 = math.tanh %25 : vector<8x128xf32>
    %27 = arith.index_cast %21 : i32 to index
    %c0_18 = arith.constant 0 : index
    %28 = vector.load %arg9[%27, %c0_18] : memref<72x128xf32, #tpu.memory_space<vmem>>, vector<8x128xf32>
    tpu.vector_store %arg9[%27, %c0_18], %26 {strides = array<i32>} : memref<72x128xf32, #tpu.memory_space<vmem>>, vector<8x128xf32>,
    %c2_i32 = arith.constant 2 : i32
    %c8_i32_19 = arith.constant 8 : i32
    %29 = arith.muli %c2_i32, %c8_i32_19 : i32
    %30 = tpu.assume_multiple %29, 8 : i32
    %31 = arith.index_cast %30 : i32 to index
    %c0_20 = arith.constant 0 : index
    %32 = vector.load %arg8[%31, %c0_20] : memref<72x128xf32, #tpu.memory_space<vmem>>, vector<8x128xf32>
    %cst_21 = arith.constant dense<0.000000e+00> : vector<8x128xf32>
    %33 = tpu.matmul %26, %9, %cst_21 {dimension_numbers = #tpu.dot_dimension_numbers<[1], [0], [0], [1], [0, 0, 1, 1], [], []>} : vector<8x128xf32>, vector<128x128xf32>, vector<8x128xf32> -> vector<8x128xf32>
    %34 = arith.addf %32, %33 : vector<8x128xf32>
    %35 = math.tanh %34 : vector<8x128xf32>
    %36 = arith.index_cast %30 : i32 to index
    %c0_22 = arith.constant 0 : index
    %37 = vector.load %arg9[%36, %c0_22] : memref<72x128xf32, #tpu.memory_space<vmem>>, vector<8x128xf32>
    tpu.vector_store %arg9[%36, %c0_22], %35 {strides = array<i32>} : memref<72x128xf32, #tpu.memory_space<vmem>>, vector<8x128xf32>,
    %c3_i32 = arith.constant 3 : i32
    %c8_i32_23 = arith.constant 8 : i32
    %38 = arith.muli %c3_i32, %c8_i32_23 : i32
    %39 = tpu.assume_multiple %38, 8 : i32
    %40 = arith.index_cast %39 : i32 to index
    %c0_24 = arith.constant 0 : index
    %41 = vector.load %arg8[%40, %c0_24] : memref<72x128xf32, #tpu.memory_space<vmem>>, vector<8x128xf32>
    %cst_25 = arith.constant dense<0.000000e+00> : vector<8x128xf32>
    %42 = tpu.matmul %35, %9, %cst_25 {dimension_numbers = #tpu.dot_dimension_numbers<[1], [0], [0], [1], [0, 0, 1, 1], [], []>} : vector<8x128xf32>, vector<128x128xf32>, vector<8x128xf32> -> vector<8x128xf32>
    %43 = arith.addf %41, %42 : vector<8x128xf32>
    %44 = math.tanh %43 : vector<8x128xf32>
    %45 = arith.index_cast %39 : i32 to index
    %c0_26 = arith.constant 0 : index
    %46 = vector.load %arg9[%45, %c0_26] : memref<72x128xf32, #tpu.memory_space<vmem>>, vector<8x128xf32>
    tpu.vector_store %arg9[%45, %c0_26], %44 {strides = array<i32>} : memref<72x128xf32, #tpu.memory_space<vmem>>, vector<8x128xf32>,
    %c4_i32 = arith.constant 4 : i32
    %c8_i32_27 = arith.constant 8 : i32
    %47 = arith.muli %c4_i32, %c8_i32_27 : i32
    %48 = tpu.assume_multiple %47, 8 : i32
    %49 = arith.index_cast %48 : i32 to index
    %c0_28 = arith.constant 0 : index
    %50 = vector.load %arg8[%49, %c0_28] : memref<72x128xf32, #tpu.memory_space<vmem>>, vector<8x128xf32>
    %cst_29 = arith.constant dense<0.000000e+00> : vector<8x128xf32>
    %51 = tpu.matmul %44, %9, %cst_29 {dimension_numbers = #tpu.dot_dimension_numbers<[1], [0], [0], [1], [0, 0, 1, 1], [], []>} : vector<8x128xf32>, vector<128x128xf32>, vector<8x128xf32> -> vector<8x128xf32>
    %52 = arith.addf %50, %51 : vector<8x128xf32>
    %53 = math.tanh %52 : vector<8x128xf32>
    %54 = arith.index_cast %48 : i32 to index
    %c0_30 = arith.constant 0 : index
    %55 = vector.load %arg9[%54, %c0_30] : memref<72x128xf32, #tpu.memory_space<vmem>>, vector<8x128xf32>
    tpu.vector_store %arg9[%54, %c0_30], %53 {strides = array<i32>} : memref<72x128xf32, #tpu.memory_space<vmem>>, vector<8x128xf32>,
    %c5_i32 = arith.constant 5 : i32
    %c8_i32_31 = arith.constant 8 : i32
    %56 = arith.muli %c5_i32, %c8_i32_31 : i32
    %57 = tpu.assume_multiple %56, 8 : i32
    %58 = arith.index_cast %57 : i32 to index
    %c0_32 = arith.constant 0 : index
    %59 = vector.load %arg8[%58, %c0_32] : memref<72x128xf32, #tpu.memory_space<vmem>>, vector<8x128xf32>
    %cst_33 = arith.constant dense<0.000000e+00> : vector<8x128xf32>
    %60 = tpu.matmul %53, %9, %cst_33 {dimension_numbers = #tpu.dot_dimension_numbers<[1], [0], [0], [1], [0, 0, 1, 1], [], []>} : vector<8x128xf32>, vector<128x128xf32>, vector<8x128xf32> -> vector<8x128xf32>
    %61 = arith.addf %59, %60 : vector<8x128xf32>
    %62 = math.tanh %61 : vector<8x128xf32>
    %63 = arith.index_cast %57 : i32 to index
    %c0_34 = arith.constant 0 : index
    %64 = vector.load %arg9[%63, %c0_34] : memref<72x128xf32, #tpu.memory_space<vmem>>, vector<8x128xf32>
    tpu.vector_store %arg9[%63, %c0_34], %62 {strides = array<i32>} : memref<72x128xf32, #tpu.memory_space<vmem>>, vector<8x128xf32>,
    %c6_i32 = arith.constant 6 : i32
    %c8_i32_35 = arith.constant 8 : i32
    %65 = arith.muli %c6_i32, %c8_i32_35 : i32
    %66 = tpu.assume_multiple %65, 8 : i32
    %67 = arith.index_cast %66 : i32 to index
    %c0_36 = arith.constant 0 : index
    %68 = vector.load %arg8[%67, %c0_36] : memref<72x128xf32, #tpu.memory_space<vmem>>, vector<8x128xf32>
    %cst_37 = arith.constant dense<0.000000e+00> : vector<8x128xf32>
    %69 = tpu.matmul %62, %9, %cst_37 {dimension_numbers = #tpu.dot_dimension_numbers<[1], [0], [0], [1], [0, 0, 1, 1], [], []>} : vector<8x128xf32>, vector<128x128xf32>, vector<8x128xf32> -> vector<8x128xf32>
    %70 = arith.addf %68, %69 : vector<8x128xf32>
    %71 = math.tanh %70 : vector<8x128xf32>
    %72 = arith.index_cast %66 : i32 to index
    %c0_38 = arith.constant 0 : index
    %73 = vector.load %arg9[%72, %c0_38] : memref<72x128xf32, #tpu.memory_space<vmem>>, vector<8x128xf32>
    tpu.vector_store %arg9[%72, %c0_38], %71 {strides = array<i32>} : memref<72x128xf32, #tpu.memory_space<vmem>>, vector<8x128xf32>,
    %c7_i32 = arith.constant 7 : i32
    %c8_i32_39 = arith.constant 8 : i32
    %74 = arith.muli %c7_i32, %c8_i32_39 : i32
    %75 = tpu.assume_multiple %74, 8 : i32
    %76 = arith.index_cast %75 : i32 to index
    %c0_40 = arith.constant 0 : index
    %77 = vector.load %arg8[%76, %c0_40] : memref<72x128xf32, #tpu.memory_space<vmem>>, vector<8x128xf32>
    %cst_41 = arith.constant dense<0.000000e+00> : vector<8x128xf32>
    %78 = tpu.matmul %71, %9, %cst_41 {dimension_numbers = #tpu.dot_dimension_numbers<[1], [0], [0], [1], [0, 0, 1, 1], [], []>} : vector<8x128xf32>, vector<128x128xf32>, vector<8x128xf32> -> vector<8x128xf32>
    %79 = arith.addf %77, %78 : vector<8x128xf32>
    %80 = math.tanh %79 : vector<8x128xf32>
    %81 = arith.index_cast %75 : i32 to index
    %c0_42 = arith.constant 0 : index
    %82 = vector.load %arg9[%81, %c0_42] : memref<72x128xf32, #tpu.memory_space<vmem>>, vector<8x128xf32>
    tpu.vector_store %arg9[%81, %c0_42], %80 {strides = array<i32>} : memref<72x128xf32, #tpu.memory_space<vmem>>, vector<8x128xf32>,
    %c8_i32_43 = arith.constant 8 : i32
    %c8_i32_44 = arith.constant 8 : i32
    %83 = arith.muli %c8_i32_43, %c8_i32_44 : i32
    %84 = tpu.assume_multiple %83, 8 : i32
    %85 = arith.index_cast %84 : i32 to index
    %c0_45 = arith.constant 0 : index
    %86 = vector.load %arg8[%85, %c0_45] : memref<72x128xf32, #tpu.memory_space<vmem>>, vector<8x128xf32>
    %cst_46 = arith.constant dense<0.000000e+00> : vector<8x128xf32>
    %87 = tpu.matmul %80, %9, %cst_46 {dimension_numbers = #tpu.dot_dimension_numbers<[1], [0], [0], [1], [0, 0, 1, 1], [], []>} : vector<8x128xf32>, vector<128x128xf32>, vector<8x128xf32> -> vector<8x128xf32>
    %88 = arith.addf %86, %87 : vector<8x128xf32>
    %89 = math.tanh %88 : vector<8x128xf32>
    %90 = arith.index_cast %84 : i32 to index
    %c0_47 = arith.constant 0 : index
    %91 = vector.load %arg9[%90, %c0_47] : memref<72x128xf32, #tpu.memory_space<vmem>>, vector<8x128xf32>
    tpu.vector_store %arg9[%90, %c0_47], %89 {strides = array<i32>} : memref<72x128xf32, #tpu.memory_space<vmem>>, vector<8x128xf32>,
    %c9_i32 = arith.constant 9 : i32
    %c0_48 = arith.constant 0 : index
    %c0_49 = arith.constant 0 : index
    %92 = vector.load %arg9[%c0_48, %c0_49] : memref<72x128xf32, #tpu.memory_space<vmem>>, vector<72x128xf32>
    %c0_50 = arith.constant 0 : index
    %c0_51 = arith.constant 0 : index
    %93 = vector.load %arg5[%c0_50, %c0_51] : memref<128x128xf32, #tpu.memory_space<vmem>>, vector<128x128xf32>
    %cst_52 = arith.constant dense<0.000000e+00> : vector<72x128xf32>
    %94 = tpu.matmul %92, %93, %cst_52 {dimension_numbers = #tpu.dot_dimension_numbers<[1], [0], [0], [1], [0, 0, 1, 1], [], []>} : vector<72x128xf32>, vector<128x128xf32>, vector<72x128xf32> -> vector<72x128xf32>
    %c0_53 = arith.constant 0 : index
    %c0_54 = arith.constant 0 : index
    %95 = vector.load %arg6[%c0_53, %c0_54] : memref<1x128xf32, #tpu.memory_space<vmem>>, vector<1x128xf32>
    %96 = vector.broadcast %95 : vector<1x128xf32> to vector<72x128xf32>
    %97 = arith.addf %94, %96 : vector<72x128xf32>
    %c0_55 = arith.constant 0 : index
    %c0_56 = arith.constant 0 : index
    %98 = vector.load %arg7[%c0_55, %c0_56] : memref<72x128xf32, #tpu.memory_space<vmem>>, vector<72x128xf32>
    tpu.vector_store %arg7[%c0_55, %c0_56], %97 {strides = array<i32>} : memref<72x128xf32, #tpu.memory_space<vmem>>, vector<72x128xf32>,
    return
  }
}

</mosaic_0001>

<llo_original>
// kernel: decoder_rnn_forward.1
$region0: #{decoder_rnn_forward.1}
  #allocation0 [shape = 'u32[]', space=smem, size = 0x4, offset = 0x4, fixed_abs, tag = 'smem constant byte address 0x4 - core index']
  #allocation1 [shape = 'u32[144,128]{1,0:T(1,128)}', space=vmem, size = 0x12000, scoped, tag = 'internal scratch']
  #allocation2 [shape = 'f32[72,128]{1,0:T(8,128)}', space=vmem, size = 0x9000, scoped, tag = 'scratch operand']
  #allocation3 [shape = 'f32[72,128]{1,0:T(8,128)}', space=vmem, size = 0x9000, scoped, tag = 'scratch operand']
  %s0 = inlined_call_operand.vmem [shape: f32[72,128], index: 0, kind: input, shape index: {}]
  %s1 = inlined_call_operand.vmem [shape: f32[8,128], index: 1, kind: input, shape index: {}]
  %s2 = inlined_call_operand.vmem [shape: f32[128,128], index: 2, kind: input, shape index: {}]
  %s3 = inlined_call_operand.vmem [shape: f32[128,128], index: 3, kind: input, shape index: {}]
  %s4 = inlined_call_operand.vmem [shape: f32[1,128], index: 4, kind: input, shape index: {}]
  %s5 = inlined_call_operand.vmem [shape: f32[128,128], index: 5, kind: input, shape index: {}]
  %s6 = inlined_call_operand.vmem [shape: f32[1,128], index: 6, kind: input, shape index: {}]
  %s7 = inlined_call_operand.vmem [shape: f32[72,128], index: 7, kind: output, shape index: {}]
  %s8 = sld [smem:[#allocation0]]
  $region38: #{decoder_rnn_forward.1} parent=0
    _
  %s10 = ssub.s32 1, %s8
  %s11 = scalar_select 0, %s10, %s8
  // Predicated region
  $region2: #{decoder_rnn_forward.1} parent=0 // pred_check
    _
  $region3: #{decoder_rnn_forward.1} parent=0 // pred_check_branch
    %13 = sbr.rel (0) target = $region5
  $region4: #{decoder_rnn_forward.1} parent=0 // pred_region
    _
  $region5: #{decoder_rnn_forward.1} parent=0 // pred_fallthru
    _
  // Predicated region
  $region6: #{decoder_rnn_forward.1} parent=0 // pred_check
    _
  $region7: #{decoder_rnn_forward.1} parent=0 // pred_check_branch
    %15 = sbr.rel (0) target = $region9
  $region8: #{decoder_rnn_forward.1} parent=0 // pred_region
    _
  $region9: #{decoder_rnn_forward.1} parent=0 // pred_fallthru
    _
  // Predicated region
  $region10: #{decoder_rnn_forward.1} parent=0 // pred_check
    _
  $region11: #{decoder_rnn_forward.1} parent=0 // pred_check_branch
    %17 = sbr.rel (0) target = $region13
  $region12: #{decoder_rnn_forward.1} parent=0 // pred_region
    _
  $region13: #{decoder_rnn_forward.1} parent=0 // pred_fallthru
    _
  // Predicated region
  $region14: #{decoder_rnn_forward.1} parent=0 // pred_check
    _
  $region15: #{decoder_rnn_forward.1} parent=0 // pred_check_branch
    %19 = sbr.rel (0) target = $region17
  $region16: #{decoder_rnn_forward.1} parent=0 // pred_region
    _
  $region17: #{decoder_rnn_forward.1} parent=0 // pred_fallthru
    _
  // Predicated region
  $region18: #{decoder_rnn_forward.1} parent=0 // pred_check
    _
  $region19: #{decoder_rnn_forward.1} parent=0 // pred_check_branch
    %21 = sbr.rel (0) target = $region21
  $region20: #{decoder_rnn_forward.1} parent=0 // pred_region
    _
  $region21: #{decoder_rnn_forward.1} parent=0 // pred_fallthru
    _
  // Predicated region
  $region22: #{decoder_rnn_forward.1} parent=0 // pred_check
    _
  $region23: #{decoder_rnn_forward.1} parent=0 // pred_check_branch
    %23 = sbr.rel (0) target = $region25
  $region24: #{decoder_rnn_forward.1} parent=0 // pred_region
    _
  $region25: #{decoder_rnn_forward.1} parent=0 // pred_fallthru
    _
  // Predicated region
  $region26: #{decoder_rnn_forward.1} parent=0 // pred_check
    _
  $region27: #{decoder_rnn_forward.1} parent=0 // pred_check_branch
    %25 = sbr.rel (0) target = $region29
  $region28: #{decoder_rnn_forward.1} parent=0 // pred_region
    _
  $region29: #{decoder_rnn_forward.1} parent=0 // pred_fallthru
    _
  %v26 = vld [vmem:[%s0] sm:$0xff]
  %v27 = vld [vmem:[%s0 + $0x8] sm:$0xff]
  %v28 = vld [vmem:[%s0 + $0x10] sm:$0xff]
  %v29 = vld [vmem:[%s0 + $0x18] sm:$0xff]
  %v30 = vld [vmem:[%s0 + $0x20] sm:$0xff]
  %v31 = vld [vmem:[%s0 + $0x28] sm:$0xff]
  %v32 = vld [vmem:[%s0 + $0x30] sm:$0xff]
  %v33 = vld [vmem:[%s0 + $0x38] sm:$0xff]
  %v34 = vld [vmem:[%s0 + $0x40] sm:$0xff]
  %v35 = vmax.f32 %v26, 0.0
  %v36 = vmax.f32 %v27, 0.0
  %v37 = vmax.f32 %v28, 0.0
  %v38 = vmax.f32 %v29, 0.0
  %v39 = vmax.f32 %v30, 0.0
  %v40 = vmax.f32 %v31, 0.0
  %v41 = vmax.f32 %v32, 0.0
  %v42 = vmax.f32 %v33, 0.0
  %v43 = vmax.f32 %v34, 0.0
  %v44 = vld [vmem:[%s2] sm:$0xff]
  %v45 = vld [vmem:[%s2 + $0x8] sm:$0xff]
  %v46 = vld [vmem:[%s2 + $0x10] sm:$0xff]
  %v47 = vld [vmem:[%s2 + $0x18] sm:$0xff]
  %v48 = vld [vmem:[%s2 + $0x20] sm:$0xff]
  %v49 = vld [vmem:[%s2 + $0x28] sm:$0xff]
  %v50 = vld [vmem:[%s2 + $0x30] sm:$0xff]
  %v51 = vld [vmem:[%s2 + $0x38] sm:$0xff]
  %v52 = vld [vmem:[%s2 + $0x40] sm:$0xff]
  %v53 = vld [vmem:[%s2 + $0x48] sm:$0xff]
  %v54 = vld [vmem:[%s2 + $0x50] sm:$0xff]
  %v55 = vld [vmem:[%s2 + $0x58] sm:$0xff]
  %v56 = vld [vmem:[%s2 + $0x60] sm:$0xff]
  %v57 = vld [vmem:[%s2 + $0x68] sm:$0xff]
  %v58 = vld [vmem:[%s2 + $0x70] sm:$0xff]
  %v59 = vld [vmem:[%s2 + $0x78] sm:$0xff]
  %v60 = vld [vmem:[%s4] sm:$0x1]
  %v62 = vlaneseq
  %v63 = vshrl.u32 %v62, 7
  %v64 = vsub.s32 0, %v63
  %v65 = vrot.slane %v60, %v64
  %67 = vmatprep.subr.mxu0 0.0
  %68 = vmatpush1.msra.mxu0 %v44
  %69 = vmatprep.subr.mxu0 0.0
  %70 = vmatpush1.msra.mxu0 %v45
  %71 = vmatprep.subr.mxu0 0.0
  %72 = vmatpush1.msra.mxu0 %v46
  %73 = vmatprep.subr.mxu0 0.0
  %74 = vmatpush1.msra.mxu0 %v47
  %75 = vmatprep.subr.mxu0 0.0
  %76 = vmatpush1.msra.mxu0 %v48
  %77 = vmatprep.subr.mxu0 0.0
  %78 = vmatpush1.msra.mxu0 %v49
  %79 = vmatprep.subr.mxu0 0.0
  %80 = vmatpush1.msra.mxu0 %v50
  %81 = vmatprep.subr.mxu0 0.0
  %82 = vmatpush1.msra.mxu0 %v51
  %83 = vmatprep.subr.mxu0 0.0
  %84 = vmatpush1.msra.mxu0 %v52
  %85 = vmatprep.subr.mxu0 0.0
  %86 = vmatpush1.msra.mxu0 %v53
  %87 = vmatprep.subr.mxu0 0.0
  %88 = vmatpush1.msra.mxu0 %v54
  %89 = vmatprep.subr.mxu0 0.0
  %90 = vmatpush1.msra.mxu0 %v55
  %91 = vmatprep.subr.mxu0 0.0
  %92 = vmatpush1.msra.mxu0 %v56
  %93 = vmatprep.subr.mxu0 0.0
  %94 = vmatpush1.msra.mxu0 %v57
  %95 = vmatprep.subr.mxu0 0.0
  %96 = vmatpush1.msra.mxu0 %v58
  %97 = vmatprep.subr.mxu0 0.0
  %98 = vmatpush1.msra.mxu0 %v59
  %99 = vmatprep.subr.mxu0 0.0
  %100 = vmatpush1.msra.mxu0 0.0
  %101 = vmatprep.subr.mxu0 0.0
  %102 = vmatpush1.msra.mxu0 0.0
  %103 = vmatprep.subr.mxu0 0.0
  %104 = vmatpush1.msra.mxu0 0.0
  %105 = vmatprep.subr.mxu0 0.0
  %106 = vmatpush1.msra.mxu0 0.0
  %107 = vmatprep.subr.mxu0 0.0
  %108 = vmatpush1.msra.mxu0 0.0
  %109 = vmatprep.subr.mxu0 0.0
  %110 = vmatpush1.msra.mxu0 0.0
  %111 = vmatprep.subr.mxu0 0.0
  %112 = vmatpush1.msra.mxu0 0.0
  %113 = vmatprep.subr.mxu0 0.0
  %114 = vmatpush1.msra.mxu0 0.0
  %115 = vmatprep.subr.mxu0 0.0
  %116 = vmatpush1.msra.mxu0 0.0
  %117 = vmatprep.subr.mxu0 0.0
  %118 = vmatpush1.msra.mxu0 0.0
  %119 = vmatprep.subr.mxu0 0.0
  %120 = vmatpush1.msra.mxu0 0.0
  %121 = vmatprep.subr.mxu0 0.0
  %122 = vmatpush1.msra.mxu0 0.0
  %123 = vmatprep.subr.mxu0 0.0
  %124 = vmatpush1.msra.mxu0 0.0
  %125 = vmatprep.subr.mxu0 0.0
  %126 = vmatpush1.msra.mxu0 0.0
  %127 = vmatprep.subr.mxu0 0.0
  %128 = vmatpush1.msra.mxu0 0.0
  %129 = vmatprep.subr.mxu0 0.0
  %130 = vmatpush1.msra.mxu0 0.0
  %131 = vmatprep.mubr.f32.mxu0 0.0
  %132 = vmatmul.mubr.f32.gmra.mrb[0].mxu0 %v35
  %v133 = vpop.f32.mrb[0].mxu0
  %v134 = vadd.f32 %v65, %v133
  %v135 = vpop.f32.mrb[0].mxu0
  %136 = vmatprep.mubr.f32.mxu0 0.0
  %137 = vmatmul.mubr.f32.gmra.mrb[0].mxu0 %v36
  %v138 = vpop.f32.mrb[0].mxu0
  %v139 = vadd.f32 %v65, %v138
  %v140 = vpop.f32.mrb[0].mxu0
  %141 = vmatprep.mubr.f32.mxu0 0.0
  %142 = vmatmul.mubr.f32.gmra.mrb[0].mxu0 %v37
  %v143 = vpop.f32.mrb[0].mxu0
  %v144 = vadd.f32 %v65, %v143
  %v145 = vpop.f32.mrb[0].mxu0
  %146 = vmatprep.mubr.f32.mxu0 0.0
  %147 = vmatmul.mubr.f32.gmra.mrb[0].mxu0 %v38
  %v148 = vpop.f32.mrb[0].mxu0
  %v149 = vadd.f32 %v65, %v148
  %v150 = vpop.f32.mrb[0].mxu0
  %151 = vmatprep.mubr.f32.mxu0 0.0
  %152 = vmatmul.mubr.f32.gmra.mrb[0].mxu0 %v39
  %v153 = vpop.f32.mrb[0].mxu0
  %v154 = vadd.f32 %v65, %v153
  %v155 = vpop.f32.mrb[0].mxu0
  %156 = vmatprep.mubr.f32.mxu0 0.0
  %157 = vmatmul.mubr.f32.gmra.mrb[0].mxu0 %v40
  %v158 = vpop.f32.mrb[0].mxu0
  %v159 = vadd.f32 %v65, %v158
  %v160 = vpop.f32.mrb[0].mxu0
  %161 = vmatprep.mubr.f32.mxu0 0.0
  %162 = vmatmul.mubr.f32.gmra.mrb[0].mxu0 %v41
  %v163 = vpop.f32.mrb[0].mxu0
  %v164 = vadd.f32 %v65, %v163
  %v165 = vpop.f32.mrb[0].mxu0
  %166 = vmatprep.mubr.f32.mxu0 0.0
  %167 = vmatmul.mubr.f32.gmra.mrb[0].mxu0 %v42
  %v168 = vpop.f32.mrb[0].mxu0
  %v169 = vadd.f32 %v65, %v168
  %v170 = vpop.f32.mrb[0].mxu0
  %171 = vmatprep.mubr.f32.mxu0 0.0
  %172 = vmatmul.mubr.f32.gmra.mrb[0].mxu0 %v43
  %v173 = vpop.f32.mrb[0].mxu0
  %v174 = vadd.f32 %v65, %v173
  %v175 = vpop.f32.mrb[0].mxu0
  %176 = vdwg.mxu0
  %177 = vst [vmem:[#allocation2] sm:$0xff] %v134
  %178 = vst [vmem:[#allocation2 + $0x8] sm:$0xff] %v139
  %179 = vst [vmem:[#allocation2 + $0x10] sm:$0xff] %v144
  %180 = vst [vmem:[#allocation2 + $0x18] sm:$0xff] %v149
  %181 = vst [vmem:[#allocation2 + $0x20] sm:$0xff] %v154
  %182 = vst [vmem:[#allocation2 + $0x28] sm:$0xff] %v159
  %183 = vst [vmem:[#allocation2 + $0x30] sm:$0xff] %v164
  %184 = vst [vmem:[#allocation2 + $0x38] sm:$0xff] %v169
  %185 = vst [vmem:[#allocation2 + $0x40] sm:$0xff] %v174
  %v186 = vld [vmem:[%s3] sm:$0xff]
  %v187 = vld [vmem:[%s3 + $0x8] sm:$0xff]
  %v188 = vld [vmem:[%s3 + $0x10] sm:$0xff]
  %v189 = vld [vmem:[%s3 + $0x18] sm:$0xff]
  %v190 = vld [vmem:[%s3 + $0x20] sm:$0xff]
  %v191 = vld [vmem:[%s3 + $0x28] sm:$0xff]
  %v192 = vld [vmem:[%s3 + $0x30] sm:$0xff]
  %v193 = vld [vmem:[%s3 + $0x38] sm:$0xff]
  %v194 = vld [vmem:[%s3 + $0x40] sm:$0xff]
  %v195 = vld [vmem:[%s3 + $0x48] sm:$0xff]
  %v196 = vld [vmem:[%s3 + $0x50] sm:$0xff]
  %v197 = vld [vmem:[%s3 + $0x58] sm:$0xff]
  %v198 = vld [vmem:[%s3 + $0x60] sm:$0xff]
  %v199 = vld [vmem:[%s3 + $0x68] sm:$0xff]
  %v200 = vld [vmem:[%s3 + $0x70] sm:$0xff]
  %v201 = vld [vmem:[%s3 + $0x78] sm:$0xff]
  %v202 = vld [vmem:[%s1] sm:$0xff]
  %v203 = vld [vmem:[#allocation2] sm:$0xff]
  %204 = vmatprep.subr.mxu0 0.0
  %205 = vmatpush1.msra.mxu0 %v186
  %206 = vmatprep.subr.mxu0 0.0
  %207 = vmatpush1.msra.mxu0 %v187
  %208 = vmatprep.subr.mxu0 0.0
  %209 = vmatpush1.msra.mxu0 %v188
  %210 = vmatprep.subr.mxu0 0.0
  %211 = vmatpush1.msra.mxu0 %v189
  %212 = vmatprep.subr.mxu0 0.0
  %213 = vmatpush1.msra.mxu0 %v190
  %214 = vmatprep.subr.mxu0 0.0
  %215 = vmatpush1.msra.mxu0 %v191
  %216 = vmatprep.subr.mxu0 0.0
  %217 = vmatpush1.msra.mxu0 %v192
  %218 = vmatprep.subr.mxu0 0.0
  %219 = vmatpush1.msra.mxu0 %v193
  %220 = vmatprep.subr.mxu0 0.0
  %221 = vmatpush1.msra.mxu0 %v194
  %222 = vmatprep.subr.mxu0 0.0
  %223 = vmatpush1.msra.mxu0 %v195
  %224 = vmatprep.subr.mxu0 0.0
  %225 = vmatpush1.msra.mxu0 %v196
  %226 = vmatprep.subr.mxu0 0.0
  %227 = vmatpush1.msra.mxu0 %v197
  %228 = vmatprep.subr.mxu0 0.0
  %229 = vmatpush1.msra.mxu0 %v198
  %230 = vmatprep.subr.mxu0 0.0
  %231 = vmatpush1.msra.mxu0 %v199
  %232 = vmatprep.subr.mxu0 0.0
  %233 = vmatpush1.msra.mxu0 %v200
  %234 = vmatprep.subr.mxu0 0.0
  %235 = vmatpush1.msra.mxu0 %v201
  %236 = vmatprep.subr.mxu0 0.0
  %237 = vmatpush1.msra.mxu0 0.0
  %238 = vmatprep.subr.mxu0 0.0
  %239 = vmatpush1.msra.mxu0 0.0
  %240 = vmatprep.subr.mxu0 0.0
  %241 = vmatpush1.msra.mxu0 0.0
  %242 = vmatprep.subr.mxu0 0.0
  %243 = vmatpush1.msra.mxu0 0.0
  %244 = vmatprep.subr.mxu0 0.0
  %245 = vmatpush1.msra.mxu0 0.0
  %246 = vmatprep.subr.mxu0 0.0
  %247 = vmatpush1.msra.mxu0 0.0
  %248 = vmatprep.subr.mxu0 0.0
  %249 = vmatpush1.msra.mxu0 0.0
  %250 = vmatprep.subr.mxu0 0.0
  %251 = vmatpush1.msra.mxu0 0.0
  %252 = vmatprep.subr.mxu0 0.0
  %253 = vmatpush1.msra.mxu0 0.0
  %254 = vmatprep.subr.mxu0 0.0
  %255 = vmatpush1.msra.mxu0 0.0
  %256 = vmatprep.subr.mxu0 0.0
  %257 = vmatpush1.msra.mxu0 0.0
  %258 = vmatprep.subr.mxu0 0.0
  %259 = vmatpush1.msra.mxu0 0.0
  %260 = vmatprep.subr.mxu0 0.0
  %261 = vmatpush1.msra.mxu0 0.0
  %262 = vmatprep.subr.mxu0 0.0
  %263 = vmatpush1.msra.mxu0 0.0
  %264 = vmatprep.subr.mxu0 0.0
  %265 = vmatpush1.msra.mxu0 0.0
  %266 = vmatprep.subr.mxu0 0.0
  %267 = vmatpush1.msra.mxu0 0.0
  %268 = vmatprep.mubr.f32.mxu0 0.0
  %269 = vmatmul.mubr.f32.gmra.mrb[0].mxu0 %v202
  %v270 = vpop.f32.mrb[0].mxu0
  %v271 = vadd.f32 0.0, %v270
  %v272 = vpop.f32.mrb[0].mxu0
  %273 = vdwg.mxu0
  %v274 = vadd.f32 %v203, %v271
  %v275 = vtanh.pop %v274
  %276 = vst [vmem:[#allocation3] sm:$0xff] %v275
  %s277 = scalar_lea.vmem [#allocation2], 8
  %v278 = vld [vmem:[%s277] sm:$0xff]
  %279 = vmatprep.subr.mxu0 0.0
  %280 = vmatpush1.msra.mxu0 %v186
  %281 = vmatprep.subr.mxu0 0.0
  %282 = vmatpush1.msra.mxu0 %v187
  %283 = vmatprep.subr.mxu0 0.0
  %284 = vmatpush1.msra.mxu0 %v188
  %285 = vmatprep.subr.mxu0 0.0
  %286 = vmatpush1.msra.mxu0 %v189
  %287 = vmatprep.subr.mxu0 0.0
  %288 = vmatpush1.msra.mxu0 %v190
  %289 = vmatprep.subr.mxu0 0.0
  %290 = vmatpush1.msra.mxu0 %v191
  %291 = vmatprep.subr.mxu0 0.0
  %292 = vmatpush1.msra.mxu0 %v192
  %293 = vmatprep.subr.mxu0 0.0
  %294 = vmatpush1.msra.mxu0 %v193
  %295 = vmatprep.subr.mxu0 0.0
  %296 = vmatpush1.msra.mxu0 %v194
  %297 = vmatprep.subr.mxu0 0.0
  %298 = vmatpush1.msra.mxu0 %v195
  %299 = vmatprep.subr.mxu0 0.0
  %300 = vmatpush1.msra.mxu0 %v196
  %301 = vmatprep.subr.mxu0 0.0
  %302 = vmatpush1.msra.mxu0 %v197
  %303 = vmatprep.subr.mxu0 0.0
  %304 = vmatpush1.msra.mxu0 %v198
  %305 = vmatprep.subr.mxu0 0.0
  %306 = vmatpush1.msra.mxu0 %v199
  %307 = vmatprep.subr.mxu0 0.0
  %308 = vmatpush1.msra.mxu0 %v200
  %309 = vmatprep.subr.mxu0 0.0
  %310 = vmatpush1.msra.mxu0 %v201
  %311 = vmatprep.subr.mxu0 0.0
  %312 = vmatpush1.msra.mxu0 0.0
  %313 = vmatprep.subr.mxu0 0.0
  %314 = vmatpush1.msra.mxu0 0.0
  %315 = vmatprep.subr.mxu0 0.0
  %316 = vmatpush1.msra.mxu0 0.0
  %317 = vmatprep.subr.mxu0 0.0
  %318 = vmatpush1.msra.mxu0 0.0
  %319 = vmatprep.subr.mxu0 0.0
  %320 = vmatpush1.msra.mxu0 0.0
  %321 = vmatprep.subr.mxu0 0.0
  %322 = vmatpush1.msra.mxu0 0.0
  %323 = vmatprep.subr.mxu0 0.0
  %324 = vmatpush1.msra.mxu0 0.0
  %325 = vmatprep.subr.mxu0 0.0
  %326 = vmatpush1.msra.mxu0 0.0
  %327 = vmatprep.subr.mxu0 0.0
  %328 = vmatpush1.msra.mxu0 0.0
  %329 = vmatprep.subr.mxu0 0.0
  %330 = vmatpush1.msra.mxu0 0.0
  %331 = vmatprep.subr.mxu0 0.0
  %332 = vmatpush1.msra.mxu0 0.0
  %333 = vmatprep.subr.mxu0 0.0
  %334 = vmatpush1.msra.mxu0 0.0
  %335 = vmatprep.subr.mxu0 0.0
  %336 = vmatpush1.msra.mxu0 0.0
  %337 = vmatprep.subr.mxu0 0.0
  %338 = vmatpush1.msra.mxu0 0.0
  %339 = vmatprep.subr.mxu0 0.0
  %340 = vmatpush1.msra.mxu0 0.0
  %341 = vmatprep.subr.mxu0 0.0
  %342 = vmatpush1.msra.mxu0 0.0
  %343 = vmatprep.mubr.f32.mxu0 0.0
  %344 = vmatmul.mubr.f32.gmra.mrb[0].mxu0 %v275
  %v345 = vpop.f32.mrb[0].mxu0
  %v346 = vadd.f32 0.0, %v345
  %v347 = vpop.f32.mrb[0].mxu0
  %348 = vdwg.mxu0
  %v349 = vadd.f32 %v278, %v346
  %v350 = vtanh.pop %v349
  %s351 = scalar_lea.vmem [#allocation3], 8
  %352 = vst [vmem:[%s351] sm:$0xff] %v350
  %s353 = scalar_lea.vmem [#allocation2], 16
  %v354 = vld [vmem:[%s353] sm:$0xff]
  %355 = vmatprep.subr.mxu0 0.0
  %356 = vmatpush1.msra.mxu0 %v186
  %357 = vmatprep.subr.mxu0 0.0
  %358 = vmatpush1.msra.mxu0 %v187
  %359 = vmatprep.subr.mxu0 0.0
  %360 = vmatpush1.msra.mxu0 %v188
  %361 = vmatprep.subr.mxu0 0.0
  %362 = vmatpush1.msra.mxu0 %v189
  %363 = vmatprep.subr.mxu0 0.0
  %364 = vmatpush1.msra.mxu0 %v190
  %365 = vmatprep.subr.mxu0 0.0
  %366 = vmatpush1.msra.mxu0 %v191
  %367 = vmatprep.subr.mxu0 0.0
  %368 = vmatpush1.msra.mxu0 %v192
  %369 = vmatprep.subr.mxu0 0.0
  %370 = vmatpush1.msra.mxu0 %v193
  %371 = vmatprep.subr.mxu0 0.0
  %372 = vmatpush1.msra.mxu0 %v194
  %373 = vmatprep.subr.mxu0 0.0
  %374 = vmatpush1.msra.mxu0 %v195
  %375 = vmatprep.subr.mxu0 0.0
  %376 = vmatpush1.msra.mxu0 %v196
  %377 = vmatprep.subr.mxu0 0.0
  %378 = vmatpush1.msra.mxu0 %v197
  %379 = vmatprep.subr.mxu0 0.0
  %380 = vmatpush1.msra.mxu0 %v198
  %381 = vmatprep.subr.mxu0 0.0
  %382 = vmatpush1.msra.mxu0 %v199
  %383 = vmatprep.subr.mxu0 0.0
  %384 = vmatpush1.msra.mxu0 %v200
  %385 = vmatprep.subr.mxu0 0.0
  %386 = vmatpush1.msra.mxu0 %v201
  %387 = vmatprep.subr.mxu0 0.0
  %388 = vmatpush1.msra.mxu0 0.0
  %389 = vmatprep.subr.mxu0 0.0
  %390 = vmatpush1.msra.mxu0 0.0
  %391 = vmatprep.subr.mxu0 0.0
  %392 = vmatpush1.msra.mxu0 0.0
  %393 = vmatprep.subr.mxu0 0.0
  %394 = vmatpush1.msra.mxu0 0.0
  %395 = vmatprep.subr.mxu0 0.0
  %396 = vmatpush1.msra.mxu0 0.0
  %397 = vmatprep.subr.mxu0 0.0
  %398 = vmatpush1.msra.mxu0 0.0
  %399 = vmatprep.subr.mxu0 0.0
  %400 = vmatpush1.msra.mxu0 0.0
  %401 = vmatprep.subr.mxu0 0.0
  %402 = vmatpush1.msra.mxu0 0.0
  %403 = vmatprep.subr.mxu0 0.0
  %404 = vmatpush1.msra.mxu0 0.0
  %405 = vmatprep.subr.mxu0 0.0
  %406 = vmatpush1.msra.mxu0 0.0
  %407 = vmatprep.subr.mxu0 0.0
  %408 = vmatpush1.msra.mxu0 0.0
  %409 = vmatprep.subr.mxu0 0.0
  %410 = vmatpush1.msra.mxu0 0.0
  %411 = vmatprep.subr.mxu0 0.0
  %412 = vmatpush1.msra.mxu0 0.0
  %413 = vmatprep.subr.mxu0 0.0
  %414 = vmatpush1.msra.mxu0 0.0
  %415 = vmatprep.subr.mxu0 0.0
  %416 = vmatpush1.msra.mxu0 0.0
  %417 = vmatprep.subr.mxu0 0.0
  %418 = vmatpush1.msra.mxu0 0.0
  %419 = vmatprep.mubr.f32.mxu0 0.0
  %420 = vmatmul.mubr.f32.gmra.mrb[0].mxu0 %v350
  %v421 = vpop.f32.mrb[0].mxu0
  %v422 = vadd.f32 0.0, %v421
  %v423 = vpop.f32.mrb[0].mxu0
  %424 = vdwg.mxu0
  %v425 = vadd.f32 %v354, %v422
  %v426 = vtanh.pop %v425
  %s427 = scalar_lea.vmem [#allocation3], 16
  %428 = vst [vmem:[%s427] sm:$0xff] %v426
  %s429 = scalar_lea.vmem [#allocation2], 24
  %v430 = vld [vmem:[%s429] sm:$0xff]
  %431 = vmatprep.subr.mxu0 0.0
  %432 = vmatpush1.msra.mxu0 %v186
  %433 = vmatprep.subr.mxu0 0.0
  %434 = vmatpush1.msra.mxu0 %v187
  %435 = vmatprep.subr.mxu0 0.0
  %436 = vmatpush1.msra.mxu0 %v188
  %437 = vmatprep.subr.mxu0 0.0
  %438 = vmatpush1.msra.mxu0 %v189
  %439 = vmatprep.subr.mxu0 0.0
  %440 = vmatpush1.msra.mxu0 %v190
  %441 = vmatprep.subr.mxu0 0.0
  %442 = vmatpush1.msra.mxu0 %v191
  %443 = vmatprep.subr.mxu0 0.0
  %444 = vmatpush1.msra.mxu0 %v192
  %445 = vmatprep.subr.mxu0 0.0
  %446 = vmatpush1.msra.mxu0 %v193
  %447 = vmatprep.subr.mxu0 0.0
  %448 = vmatpush1.msra.mxu0 %v194
  %449 = vmatprep.subr.mxu0 0.0
  %450 = vmatpush1.msra.mxu0 %v195
  %451 = vmatprep.subr.mxu0 0.0
  %452 = vmatpush1.msra.mxu0 %v196
  %453 = vmatprep.subr.mxu0 0.0
  %454 = vmatpush1.msra.mxu0 %v197
  %455 = vmatprep.subr.mxu0 0.0
  %456 = vmatpush1.msra.mxu0 %v198
  %457 = vmatprep.subr.mxu0 0.0
  %458 = vmatpush1.msra.mxu0 %v199
  %459 = vmatprep.subr.mxu0 0.0
  %460 = vmatpush1.msra.mxu0 %v200
  %461 = vmatprep.subr.mxu0 0.0
  %462 = vmatpush1.msra.mxu0 %v201
  %463 = vmatprep.subr.mxu0 0.0
  %464 = vmatpush1.msra.mxu0 0.0
  %465 = vmatprep.subr.mxu0 0.0
  %466 = vmatpush1.msra.mxu0 0.0
  %467 = vmatprep.subr.mxu0 0.0
  %468 = vmatpush1.msra.mxu0 0.0
  %469 = vmatprep.subr.mxu0 0.0
  %470 = vmatpush1.msra.mxu0 0.0
  %471 = vmatprep.subr.mxu0 0.0
  %472 = vmatpush1.msra.mxu0 0.0
  %473 = vmatprep.subr.mxu0 0.0
  %474 = vmatpush1.msra.mxu0 0.0
  %475 = vmatprep.subr.mxu0 0.0
  %476 = vmatpush1.msra.mxu0 0.0
  %477 = vmatprep.subr.mxu0 0.0
  %478 = vmatpush1.msra.mxu0 0.0
  %479 = vmatprep.subr.mxu0 0.0
  %480 = vmatpush1.msra.mxu0 0.0
  %481 = vmatprep.subr.mxu0 0.0
  %482 = vmatpush1.msra.mxu0 0.0
  %483 = vmatprep.subr.mxu0 0.0
  %484 = vmatpush1.msra.mxu0 0.0
  %485 = vmatprep.subr.mxu0 0.0
  %486 = vmatpush1.msra.mxu0 0.0
  %487 = vmatprep.subr.mxu0 0.0
  %488 = vmatpush1.msra.mxu0 0.0
  %489 = vmatprep.subr.mxu0 0.0
  %490 = vmatpush1.msra.mxu0 0.0
  %491 = vmatprep.subr.mxu0 0.0
  %492 = vmatpush1.msra.mxu0 0.0
  %493 = vmatprep.subr.mxu0 0.0
  %494 = vmatpush1.msra.mxu0 0.0
  %495 = vmatprep.mubr.f32.mxu0 0.0
  %496 = vmatmul.mubr.f32.gmra.mrb[0].mxu0 %v426
  %v497 = vpop.f32.mrb[0].mxu0
  %v498 = vadd.f32 0.0, %v497
  %v499 = vpop.f32.mrb[0].mxu0
  %500 = vdwg.mxu0
  %v501 = vadd.f32 %v430, %v498
  %v502 = vtanh.pop %v501
  %s503 = scalar_lea.vmem [#allocation3], 24
  %504 = vst [vmem:[%s503] sm:$0xff] %v502
  %s505 = scalar_lea.vmem [#allocation2], 32
  %v506 = vld [vmem:[%s505] sm:$0xff]
  %507 = vmatprep.subr.mxu0 0.0
  %508 = vmatpush1.msra.mxu0 %v186
  %509 = vmatprep.subr.mxu0 0.0
  %510 = vmatpush1.msra.mxu0 %v187
  %511 = vmatprep.subr.mxu0 0.0
  %512 = vmatpush1.msra.mxu0 %v188
  %513 = vmatprep.subr.mxu0 0.0
  %514 = vmatpush1.msra.mxu0 %v189
  %515 = vmatprep.subr.mxu0 0.0
  %516 = vmatpush1.msra.mxu0 %v190
  %517 = vmatprep.subr.mxu0 0.0
  %518 = vmatpush1.msra.mxu0 %v191
  %519 = vmatprep.subr.mxu0 0.0
  %520 = vmatpush1.msra.mxu0 %v192
  %521 = vmatprep.subr.mxu0 0.0
  %522 = vmatpush1.msra.mxu0 %v193
  %523 = vmatprep.subr.mxu0 0.0
  %524 = vmatpush1.msra.mxu0 %v194
  %525 = vmatprep.subr.mxu0 0.0
  %526 = vmatpush1.msra.mxu0 %v195
  %527 = vmatprep.subr.mxu0 0.0
  %528 = vmatpush1.msra.mxu0 %v196
  %529 = vmatprep.subr.mxu0 0.0
  %530 = vmatpush1.msra.mxu0 %v197
  %531 = vmatprep.subr.mxu0 0.0
  %532 = vmatpush1.msra.mxu0 %v198
  %533 = vmatprep.subr.mxu0 0.0
  %534 = vmatpush1.msra.mxu0 %v199
  %535 = vmatprep.subr.mxu0 0.0
  %536 = vmatpush1.msra.mxu0 %v200
  %537 = vmatprep.subr.mxu0 0.0
  %538 = vmatpush1.msra.mxu0 %v201
  %539 = vmatprep.subr.mxu0 0.0
  %540 = vmatpush1.msra.mxu0 0.0
  %541 = vmatprep.subr.mxu0 0.0
  %542 = vmatpush1.msra.mxu0 0.0
  %543 = vmatprep.subr.mxu0 0.0
  %544 = vmatpush1.msra.mxu0 0.0
  %545 = vmatprep.subr.mxu0 0.0
  %546 = vmatpush1.msra.mxu0 0.0
  %547 = vmatprep.subr.mxu0 0.0
  %548 = vmatpush1.msra.mxu0 0.0
  %549 = vmatprep.subr.mxu0 0.0
  %550 = vmatpush1.msra.mxu0 0.0
  %551 = vmatprep.subr.mxu0 0.0
  %552 = vmatpush1.msra.mxu0 0.0
  %553 = vmatprep.subr.mxu0 0.0
  %554 = vmatpush1.msra.mxu0 0.0
  %555 = vmatprep.subr.mxu0 0.0
  %556 = vmatpush1.msra.mxu0 0.0
  %557 = vmatprep.subr.mxu0 0.0
  %558 = vmatpush1.msra.mxu0 0.0
  %559 = vmatprep.subr.mxu0 0.0
  %560 = vmatpush1.msra.mxu0 0.0
  %561 = vmatprep.subr.mxu0 0.0
  %562 = vmatpush1.msra.mxu0 0.0
  %563 = vmatprep.subr.mxu0 0.0
  %564 = vmatpush1.msra.mxu0 0.0
  %565 = vmatprep.subr.mxu0 0.0
  %566 = vmatpush1.msra.mxu0 0.0
  %567 = vmatprep.subr.mxu0 0.0
  %568 = vmatpush1.msra.mxu0 0.0
  %569 = vmatprep.subr.mxu0 0.0
  %570 = vmatpush1.msra.mxu0 0.0
  %571 = vmatprep.mubr.f32.mxu0 0.0
  %572 = vmatmul.mubr.f32.gmra.mrb[0].mxu0 %v502
  %v573 = vpop.f32.mrb[0].mxu0
  %v574 = vadd.f32 0.0, %v573
  %v575 = vpop.f32.mrb[0].mxu0
  %576 = vdwg.mxu0
  %v577 = vadd.f32 %v506, %v574
  %v578 = vtanh.pop %v577
  %s579 = scalar_lea.vmem [#allocation3], 32
  %580 = vst [vmem:[%s579] sm:$0xff] %v578
  %s581 = scalar_lea.vmem [#allocation2], 40
  %v582 = vld [vmem:[%s581] sm:$0xff]
  %583 = vmatprep.subr.mxu0 0.0
  %584 = vmatpush1.msra.mxu0 %v186
  %585 = vmatprep.subr.mxu0 0.0
  %586 = vmatpush1.msra.mxu0 %v187
  %587 = vmatprep.subr.mxu0 0.0
  %588 = vmatpush1.msra.mxu0 %v188
  %589 = vmatprep.subr.mxu0 0.0
  %590 = vmatpush1.msra.mxu0 %v189
  %591 = vmatprep.subr.mxu0 0.0
  %592 = vmatpush1.msra.mxu0 %v190
  %593 = vmatprep.subr.mxu0 0.0
  %594 = vmatpush1.msra.mxu0 %v191
  %595 = vmatprep.subr.mxu0 0.0
  %596 = vmatpush1.msra.mxu0 %v192
  %597 = vmatprep.subr.mxu0 0.0
  %598 = vmatpush1.msra.mxu0 %v193
  %599 = vmatprep.subr.mxu0 0.0
  %600 = vmatpush1.msra.mxu0 %v194
  %601 = vmatprep.subr.mxu0 0.0
  %602 = vmatpush1.msra.mxu0 %v195
  %603 = vmatprep.subr.mxu0 0.0
  %604 = vmatpush1.msra.mxu0 %v196
  %605 = vmatprep.subr.mxu0 0.0
  %606 = vmatpush1.msra.mxu0 %v197
  %607 = vmatprep.subr.mxu0 0.0
  %608 = vmatpush1.msra.mxu0 %v198
  %609 = vmatprep.subr.mxu0 0.0
  %610 = vmatpush1.msra.mxu0 %v199
  %611 = vmatprep.subr.mxu0 0.0
  %612 = vmatpush1.msra.mxu0 %v200
  %613 = vmatprep.subr.mxu0 0.0
  %614 = vmatpush1.msra.mxu0 %v201
  %615 = vmatprep.subr.mxu0 0.0
  %616 = vmatpush1.msra.mxu0 0.0
  %617 = vmatprep.subr.mxu0 0.0
  %618 = vmatpush1.msra.mxu0 0.0
  %619 = vmatprep.subr.mxu0 0.0
  %620 = vmatpush1.msra.mxu0 0.0
  %621 = vmatprep.subr.mxu0 0.0
  %622 = vmatpush1.msra.mxu0 0.0
  %623 = vmatprep.subr.mxu0 0.0
  %624 = vmatpush1.msra.mxu0 0.0
  %625 = vmatprep.subr.mxu0 0.0
  %626 = vmatpush1.msra.mxu0 0.0
  %627 = vmatprep.subr.mxu0 0.0
  %628 = vmatpush1.msra.mxu0 0.0
  %629 = vmatprep.subr.mxu0 0.0
  %630 = vmatpush1.msra.mxu0 0.0
  %631 = vmatprep.subr.mxu0 0.0
  %632 = vmatpush1.msra.mxu0 0.0
  %633 = vmatprep.subr.mxu0 0.0
  %634 = vmatpush1.msra.mxu0 0.0
  %635 = vmatprep.subr.mxu0 0.0
  %636 = vmatpush1.msra.mxu0 0.0
  %637 = vmatprep.subr.mxu0 0.0
  %638 = vmatpush1.msra.mxu0 0.0
  %639 = vmatprep.subr.mxu0 0.0
  %640 = vmatpush1.msra.mxu0 0.0
  %641 = vmatprep.subr.mxu0 0.0
  %642 = vmatpush1.msra.mxu0 0.0
  %643 = vmatprep.subr.mxu0 0.0
  %644 = vmatpush1.msra.mxu0 0.0
  %645 = vmatprep.subr.mxu0 0.0
  %646 = vmatpush1.msra.mxu0 0.0
  %647 = vmatprep.mubr.f32.mxu0 0.0
  %648 = vmatmul.mubr.f32.gmra.mrb[0].mxu0 %v578
  %v649 = vpop.f32.mrb[0].mxu0
  %v650 = vadd.f32 0.0, %v649
  %v651 = vpop.f32.mrb[0].mxu0
  %652 = vdwg.mxu0
  %v653 = vadd.f32 %v582, %v650
  %v654 = vtanh.pop %v653
  %s655 = scalar_lea.vmem [#allocation3], 40
  %656 = vst [vmem:[%s655] sm:$0xff] %v654
  %s657 = scalar_lea.vmem [#allocation2], 48
  %v658 = vld [vmem:[%s657] sm:$0xff]
  %659 = vmatprep.subr.mxu0 0.0
  %660 = vmatpush1.msra.mxu0 %v186
  %661 = vmatprep.subr.mxu0 0.0
  %662 = vmatpush1.msra.mxu0 %v187
  %663 = vmatprep.subr.mxu0 0.0
  %664 = vmatpush1.msra.mxu0 %v188
  %665 = vmatprep.subr.mxu0 0.0
  %666 = vmatpush1.msra.mxu0 %v189
  %667 = vmatprep.subr.mxu0 0.0
  %668 = vmatpush1.msra.mxu0 %v190
  %669 = vmatprep.subr.mxu0 0.0
  %670 = vmatpush1.msra.mxu0 %v191
  %671 = vmatprep.subr.mxu0 0.0
  %672 = vmatpush1.msra.mxu0 %v192
  %673 = vmatprep.subr.mxu0 0.0
  %674 = vmatpush1.msra.mxu0 %v193
  %675 = vmatprep.subr.mxu0 0.0
  %676 = vmatpush1.msra.mxu0 %v194
  %677 = vmatprep.subr.mxu0 0.0
  %678 = vmatpush1.msra.mxu0 %v195
  %679 = vmatprep.subr.mxu0 0.0
  %680 = vmatpush1.msra.mxu0 %v196
  %681 = vmatprep.subr.mxu0 0.0
  %682 = vmatpush1.msra.mxu0 %v197
  %683 = vmatprep.subr.mxu0 0.0
  %684 = vmatpush1.msra.mxu0 %v198
  %685 = vmatprep.subr.mxu0 0.0
  %686 = vmatpush1.msra.mxu0 %v199
  %687 = vmatprep.subr.mxu0 0.0
  %688 = vmatpush1.msra.mxu0 %v200
  %689 = vmatprep.subr.mxu0 0.0
  %690 = vmatpush1.msra.mxu0 %v201
  %691 = vmatprep.subr.mxu0 0.0
  %692 = vmatpush1.msra.mxu0 0.0
  %693 = vmatprep.subr.mxu0 0.0
  %694 = vmatpush1.msra.mxu0 0.0
  %695 = vmatprep.subr.mxu0 0.0
  %696 = vmatpush1.msra.mxu0 0.0
  %697 = vmatprep.subr.mxu0 0.0
  %698 = vmatpush1.msra.mxu0 0.0
  %699 = vmatprep.subr.mxu0 0.0
  %700 = vmatpush1.msra.mxu0 0.0
  %701 = vmatprep.subr.mxu0 0.0
  %702 = vmatpush1.msra.mxu0 0.0
  %703 = vmatprep.subr.mxu0 0.0
  %704 = vmatpush1.msra.mxu0 0.0
  %705 = vmatprep.subr.mxu0 0.0
  %706 = vmatpush1.msra.mxu0 0.0
  %707 = vmatprep.subr.mxu0 0.0
  %708 = vmatpush1.msra.mxu0 0.0
  %709 = vmatprep.subr.mxu0 0.0
  %710 = vmatpush1.msra.mxu0 0.0
  %711 = vmatprep.subr.mxu0 0.0
  %712 = vmatpush1.msra.mxu0 0.0
  %713 = vmatprep.subr.mxu0 0.0
  %714 = vmatpush1.msra.mxu0 0.0
  %715 = vmatprep.subr.mxu0 0.0
  %716 = vmatpush1.msra.mxu0 0.0
  %717 = vmatprep.subr.mxu0 0.0
  %718 = vmatpush1.msra.mxu0 0.0
  %719 = vmatprep.subr.mxu0 0.0
  %720 = vmatpush1.msra.mxu0 0.0
  %721 = vmatprep.subr.mxu0 0.0
  %722 = vmatpush1.msra.mxu0 0.0
  %723 = vmatprep.mubr.f32.mxu0 0.0
  %724 = vmatmul.mubr.f32.gmra.mrb[0].mxu0 %v654
  %v725 = vpop.f32.mrb[0].mxu0
  %v726 = vadd.f32 0.0, %v725
  %v727 = vpop.f32.mrb[0].mxu0
  %728 = vdwg.mxu0
  %v729 = vadd.f32 %v658, %v726
  %v730 = vtanh.pop %v729
  %s731 = scalar_lea.vmem [#allocation3], 48
  %732 = vst [vmem:[%s731] sm:$0xff] %v730
  %s733 = scalar_lea.vmem [#allocation2], 56
  %v734 = vld [vmem:[%s733] sm:$0xff]
  %735 = vmatprep.subr.mxu0 0.0
  %736 = vmatpush1.msra.mxu0 %v186
  %737 = vmatprep.subr.mxu0 0.0
  %738 = vmatpush1.msra.mxu0 %v187
  %739 = vmatprep.subr.mxu0 0.0
  %740 = vmatpush1.msra.mxu0 %v188
  %741 = vmatprep.subr.mxu0 0.0
  %742 = vmatpush1.msra.mxu0 %v189
  %743 = vmatprep.subr.mxu0 0.0
  %744 = vmatpush1.msra.mxu0 %v190
  %745 = vmatprep.subr.mxu0 0.0
  %746 = vmatpush1.msra.mxu0 %v191
  %747 = vmatprep.subr.mxu0 0.0
  %748 = vmatpush1.msra.mxu0 %v192
  %749 = vmatprep.subr.mxu0 0.0
  %750 = vmatpush1.msra.mxu0 %v193
  %751 = vmatprep.subr.mxu0 0.0
  %752 = vmatpush1.msra.mxu0 %v194
  %753 = vmatprep.subr.mxu0 0.0
  %754 = vmatpush1.msra.mxu0 %v195
  %755 = vmatprep.subr.mxu0 0.0
  %756 = vmatpush1.msra.mxu0 %v196
  %757 = vmatprep.subr.mxu0 0.0
  %758 = vmatpush1.msra.mxu0 %v197
  %759 = vmatprep.subr.mxu0 0.0
  %760 = vmatpush1.msra.mxu0 %v198
  %761 = vmatprep.subr.mxu0 0.0
  %762 = vmatpush1.msra.mxu0 %v199
  %763 = vmatprep.subr.mxu0 0.0
  %764 = vmatpush1.msra.mxu0 %v200
  %765 = vmatprep.subr.mxu0 0.0
  %766 = vmatpush1.msra.mxu0 %v201
  %767 = vmatprep.subr.mxu0 0.0
  %768 = vmatpush1.msra.mxu0 0.0
  %769 = vmatprep.subr.mxu0 0.0
  %770 = vmatpush1.msra.mxu0 0.0
  %771 = vmatprep.subr.mxu0 0.0
  %772 = vmatpush1.msra.mxu0 0.0
  %773 = vmatprep.subr.mxu0 0.0
  %774 = vmatpush1.msra.mxu0 0.0
  %775 = vmatprep.subr.mxu0 0.0
  %776 = vmatpush1.msra.mxu0 0.0
  %777 = vmatprep.subr.mxu0 0.0
  %778 = vmatpush1.msra.mxu0 0.0
  %779 = vmatprep.subr.mxu0 0.0
  %780 = vmatpush1.msra.mxu0 0.0
  %781 = vmatprep.subr.mxu0 0.0
  %782 = vmatpush1.msra.mxu0 0.0
  %783 = vmatprep.subr.mxu0 0.0
  %784 = vmatpush1.msra.mxu0 0.0
  %785 = vmatprep.subr.mxu0 0.0
  %786 = vmatpush1.msra.mxu0 0.0
  %787 = vmatprep.subr.mxu0 0.0
  %788 = vmatpush1.msra.mxu0 0.0
  %789 = vmatprep.subr.mxu0 0.0
  %790 = vmatpush1.msra.mxu0 0.0
  %791 = vmatprep.subr.mxu0 0.0
  %792 = vmatpush1.msra.mxu0 0.0
  %793 = vmatprep.subr.mxu0 0.0
  %794 = vmatpush1.msra.mxu0 0.0
  %795 = vmatprep.subr.mxu0 0.0
  %796 = vmatpush1.msra.mxu0 0.0
  %797 = vmatprep.subr.mxu0 0.0
  %798 = vmatpush1.msra.mxu0 0.0
  %799 = vmatprep.mubr.f32.mxu0 0.0
  %800 = vmatmul.mubr.f32.gmra.mrb[0].mxu0 %v730
  %v801 = vpop.f32.mrb[0].mxu0
  %v802 = vadd.f32 0.0, %v801
  %v803 = vpop.f32.mrb[0].mxu0
  %804 = vdwg.mxu0
  %v805 = vadd.f32 %v734, %v802
  %v806 = vtanh.pop %v805
  %s807 = scalar_lea.vmem [#allocation3], 56
  %808 = vst [vmem:[%s807] sm:$0xff] %v806
  %s809 = scalar_lea.vmem [#allocation2], 64
  %v810 = vld [vmem:[%s809] sm:$0xff]
  %811 = vmatprep.subr.mxu0 0.0
  %812 = vmatpush1.msra.mxu0 %v186
  %813 = vmatprep.subr.mxu0 0.0
  %814 = vmatpush1.msra.mxu0 %v187
  %815 = vmatprep.subr.mxu0 0.0
  %816 = vmatpush1.msra.mxu0 %v188
  %817 = vmatprep.subr.mxu0 0.0
  %818 = vmatpush1.msra.mxu0 %v189
  %819 = vmatprep.subr.mxu0 0.0
  %820 = vmatpush1.msra.mxu0 %v190
  %821 = vmatprep.subr.mxu0 0.0
  %822 = vmatpush1.msra.mxu0 %v191
  %823 = vmatprep.subr.mxu0 0.0
  %824 = vmatpush1.msra.mxu0 %v192
  %825 = vmatprep.subr.mxu0 0.0
  %826 = vmatpush1.msra.mxu0 %v193
  %827 = vmatprep.subr.mxu0 0.0
  %828 = vmatpush1.msra.mxu0 %v194
  %829 = vmatprep.subr.mxu0 0.0
  %830 = vmatpush1.msra.mxu0 %v195
  %831 = vmatprep.subr.mxu0 0.0
  %832 = vmatpush1.msra.mxu0 %v196
  %833 = vmatprep.subr.mxu0 0.0
  %834 = vmatpush1.msra.mxu0 %v197
  %835 = vmatprep.subr.mxu0 0.0
  %836 = vmatpush1.msra.mxu0 %v198
  %837 = vmatprep.subr.mxu0 0.0
  %838 = vmatpush1.msra.mxu0 %v199
  %839 = vmatprep.subr.mxu0 0.0
  %840 = vmatpush1.msra.mxu0 %v200
  %841 = vmatprep.subr.mxu0 0.0
  %842 = vmatpush1.msra.mxu0 %v201
  %843 = vmatprep.subr.mxu0 0.0
  %844 = vmatpush1.msra.mxu0 0.0
  %845 = vmatprep.subr.mxu0 0.0
  %846 = vmatpush1.msra.mxu0 0.0
  %847 = vmatprep.subr.mxu0 0.0
  %848 = vmatpush1.msra.mxu0 0.0
  %849 = vmatprep.subr.mxu0 0.0
  %850 = vmatpush1.msra.mxu0 0.0
  %851 = vmatprep.subr.mxu0 0.0
  %852 = vmatpush1.msra.mxu0 0.0
  %853 = vmatprep.subr.mxu0 0.0
  %854 = vmatpush1.msra.mxu0 0.0
  %855 = vmatprep.subr.mxu0 0.0
  %856 = vmatpush1.msra.mxu0 0.0
  %857 = vmatprep.subr.mxu0 0.0
  %858 = vmatpush1.msra.mxu0 0.0
  %859 = vmatprep.subr.mxu0 0.0
  %860 = vmatpush1.msra.mxu0 0.0
  %861 = vmatprep.subr.mxu0 0.0
  %862 = vmatpush1.msra.mxu0 0.0
  %863 = vmatprep.subr.mxu0 0.0
  %864 = vmatpush1.msra.mxu0 0.0
  %865 = vmatprep.subr.mxu0 0.0
  %866 = vmatpush1.msra.mxu0 0.0
  %867 = vmatprep.subr.mxu0 0.0
  %868 = vmatpush1.msra.mxu0 0.0
  %869 = vmatprep.subr.mxu0 0.0
  %870 = vmatpush1.msra.mxu0 0.0
  %871 = vmatprep.subr.mxu0 0.0
  %872 = vmatpush1.msra.mxu0 0.0
  %873 = vmatprep.subr.mxu0 0.0
  %874 = vmatpush1.msra.mxu0 0.0
  %875 = vmatprep.mubr.f32.mxu0 0.0
  %876 = vmatmul.mubr.f32.gmra.mrb[0].mxu0 %v806
  %v877 = vpop.f32.mrb[0].mxu0
  %v878 = vadd.f32 0.0, %v877
  %v879 = vpop.f32.mrb[0].mxu0
  %880 = vdwg.mxu0
  %v881 = vadd.f32 %v810, %v878
  %v882 = vtanh.pop %v881
  %s883 = scalar_lea.vmem [#allocation3], 64
  %884 = vst [vmem:[%s883] sm:$0xff] %v882
  %v885 = vld [vmem:[#allocation3] sm:$0xff]
  %v886 = vld [vmem:[#allocation3 + $0x8] sm:$0xff]
  %v887 = vld [vmem:[#allocation3 + $0x10] sm:$0xff]
  %v888 = vld [vmem:[#allocation3 + $0x18] sm:$0xff]
  %v889 = vld [vmem:[#allocation3 + $0x20] sm:$0xff]
  %v890 = vld [vmem:[#allocation3 + $0x28] sm:$0xff]
  %v891 = vld [vmem:[#allocation3 + $0x30] sm:$0xff]
  %v892 = vld [vmem:[#allocation3 + $0x38] sm:$0xff]
  %v893 = vld [vmem:[#allocation3 + $0x40] sm:$0xff]
  %v894 = vld [vmem:[%s5] sm:$0xff]
  %v895 = vld [vmem:[%s5 + $0x8] sm:$0xff]
  %v896 = vld [vmem:[%s5 + $0x10] sm:$0xff]
  %v897 = vld [vmem:[%s5 + $0x18] sm:$0xff]
  %v898 = vld [vmem:[%s5 + $0x20] sm:$0xff]
  %v899 = vld [vmem:[%s5 + $0x28] sm:$0xff]
  %v900 = vld [vmem:[%s5 + $0x30] sm:$0xff]
  %v901 = vld [vmem:[%s5 + $0x38] sm:$0xff]
  %v902 = vld [vmem:[%s5 + $0x40] sm:$0xff]
  %v903 = vld [vmem:[%s5 + $0x48] sm:$0xff]
  %v904 = vld [vmem:[%s5 + $0x50] sm:$0xff]
  %v905 = vld [vmem:[%s5 + $0x58] sm:$0xff]
  %v906 = vld [vmem:[%s5 + $0x60] sm:$0xff]
  %v907 = vld [vmem:[%s5 + $0x68] sm:$0xff]
  %v908 = vld [vmem:[%s5 + $0x70] sm:$0xff]
  %v909 = vld [vmem:[%s5 + $0x78] sm:$0xff]
  %v910 = vld [vmem:[%s6] sm:$0x1]
  %v912 = vlaneseq
  %v913 = vshrl.u32 %v912, 7
  %v914 = vsub.s32 0, %v913
  %v915 = vrot.slane %v910, %v914
  %917 = vmatprep.subr.mxu0 0.0
  %918 = vmatpush1.msra.mxu0 %v894
  %919 = vmatprep.subr.mxu0 0.0
  %920 = vmatpush1.msra.mxu0 %v895
  %921 = vmatprep.subr.mxu0 0.0
  %922 = vmatpush1.msra.mxu0 %v896
  %923 = vmatprep.subr.mxu0 0.0
  %924 = vmatpush1.msra.mxu0 %v897
  %925 = vmatprep.subr.mxu0 0.0
  %926 = vmatpush1.msra.mxu0 %v898
  %927 = vmatprep.subr.mxu0 0.0
  %928 = vmatpush1.msra.mxu0 %v899
  %929 = vmatprep.subr.mxu0 0.0
  %930 = vmatpush1.msra.mxu0 %v900
  %931 = vmatprep.subr.mxu0 0.0
  %932 = vmatpush1.msra.mxu0 %v901
  %933 = vmatprep.subr.mxu0 0.0
  %934 = vmatpush1.msra.mxu0 %v902
  %935 = vmatprep.subr.mxu0 0.0
  %936 = vmatpush1.msra.mxu0 %v903
  %937 = vmatprep.subr.mxu0 0.0
  %938 = vmatpush1.msra.mxu0 %v904
  %939 = vmatprep.subr.mxu0 0.0
  %940 = vmatpush1.msra.mxu0 %v905
  %941 = vmatprep.subr.mxu0 0.0
  %942 = vmatpush1.msra.mxu0 %v906
  %943 = vmatprep.subr.mxu0 0.0
  %944 = vmatpush1.msra.mxu0 %v907
  %945 = vmatprep.subr.mxu0 0.0
  %946 = vmatpush1.msra.mxu0 %v908
  %947 = vmatprep.subr.mxu0 0.0
  %948 = vmatpush1.msra.mxu0 %v909
  %949 = vmatprep.subr.mxu0 0.0
  %950 = vmatpush1.msra.mxu0 0.0
  %951 = vmatprep.subr.mxu0 0.0
  %952 = vmatpush1.msra.mxu0 0.0
  %953 = vmatprep.subr.mxu0 0.0
  %954 = vmatpush1.msra.mxu0 0.0
  %955 = vmatprep.subr.mxu0 0.0
  %956 = vmatpush1.msra.mxu0 0.0
  %957 = vmatprep.subr.mxu0 0.0
  %958 = vmatpush1.msra.mxu0 0.0
  %959 = vmatprep.subr.mxu0 0.0
  %960 = vmatpush1.msra.mxu0 0.0
  %961 = vmatprep.subr.mxu0 0.0
  %962 = vmatpush1.msra.mxu0 0.0
  %963 = vmatprep.subr.mxu0 0.0
  %964 = vmatpush1.msra.mxu0 0.0
  %965 = vmatprep.subr.mxu0 0.0
  %966 = vmatpush1.msra.mxu0 0.0
  %967 = vmatprep.subr.mxu0 0.0
  %968 = vmatpush1.msra.mxu0 0.0
  %969 = vmatprep.subr.mxu0 0.0
  %970 = vmatpush1.msra.mxu0 0.0
  %971 = vmatprep.subr.mxu0 0.0
  %972 = vmatpush1.msra.mxu0 0.0
  %973 = vmatprep.subr.mxu0 0.0
  %974 = vmatpush1.msra.mxu0 0.0
  %975 = vmatprep.subr.mxu0 0.0
  %976 = vmatpush1.msra.mxu0 0.0
  %977 = vmatprep.subr.mxu0 0.0
  %978 = vmatpush1.msra.mxu0 0.0
  %979 = vmatprep.subr.mxu0 0.0
  %980 = vmatpush1.msra.mxu0 0.0
  %981 = vmatprep.mubr.f32.mxu0 0.0
  %982 = vmatmul.mubr.f32.gmra.mrb[0].mxu0 %v885
  %v983 = vpop.f32.mrb[0].mxu0
  %v984 = vadd.f32 %v915, %v983
  %v985 = vpop.f32.mrb[0].mxu0
  %986 = vmatprep.mubr.f32.mxu0 0.0
  %987 = vmatmul.mubr.f32.gmra.mrb[0].mxu0 %v886
  %v988 = vpop.f32.mrb[0].mxu0
  %v989 = vadd.f32 %v915, %v988
  %v990 = vpop.f32.mrb[0].mxu0
  %991 = vmatprep.mubr.f32.mxu0 0.0
  %992 = vmatmul.mubr.f32.gmra.mrb[0].mxu0 %v887
  %v993 = vpop.f32.mrb[0].mxu0
  %v994 = vadd.f32 %v915, %v993
  %v995 = vpop.f32.mrb[0].mxu0
  %996 = vmatprep.mubr.f32.mxu0 0.0
  %997 = vmatmul.mubr.f32.gmra.mrb[0].mxu0 %v888
  %v998 = vpop.f32.mrb[0].mxu0
  %v999 = vadd.f32 %v915, %v998
  %v1000 = vpop.f32.mrb[0].mxu0
  %1001 = vmatprep.mubr.f32.mxu0 0.0
  %1002 = vmatmul.mubr.f32.gmra.mrb[0].mxu0 %v889
  %v1003 = vpop.f32.mrb[0].mxu0
  %v1004 = vadd.f32 %v915, %v1003
  %v1005 = vpop.f32.mrb[0].mxu0
  %1006 = vmatprep.mubr.f32.mxu0 0.0
  %1007 = vmatmul.mubr.f32.gmra.mrb[0].mxu0 %v890
  %v1008 = vpop.f32.mrb[0].mxu0
  %v1009 = vadd.f32 %v915, %v1008
  %v1010 = vpop.f32.mrb[0].mxu0
  %1011 = vmatprep.mubr.f32.mxu0 0.0
  %1012 = vmatmul.mubr.f32.gmra.mrb[0].mxu0 %v891
  %v1013 = vpop.f32.mrb[0].mxu0
  %v1014 = vadd.f32 %v915, %v1013
  %v1015 = vpop.f32.mrb[0].mxu0
  %1016 = vmatprep.mubr.f32.mxu0 0.0
  %1017 = vmatmul.mubr.f32.gmra.mrb[0].mxu0 %v892
  %v1018 = vpop.f32.mrb[0].mxu0
  %v1019 = vadd.f32 %v915, %v1018
  %v1020 = vpop.f32.mrb[0].mxu0
  %1021 = vmatprep.mubr.f32.mxu0 0.0
  %1022 = vmatmul.mubr.f32.gmra.mrb[0].mxu0 %v893
  %v1023 = vpop.f32.mrb[0].mxu0
  %v1024 = vadd.f32 %v915, %v1023
  %v1025 = vpop.f32.mrb[0].mxu0
  %1026 = vdwg.mxu0
  %1027 = vst [vmem:[%s7] sm:$0xff] %v984
  %1028 = vst [vmem:[%s7 + $0x8] sm:$0xff] %v989
  %1029 = vst [vmem:[%s7 + $0x10] sm:$0xff] %v994
  %1030 = vst [vmem:[%s7 + $0x18] sm:$0xff] %v999
  %1031 = vst [vmem:[%s7 + $0x20] sm:$0xff] %v1004
  %1032 = vst [vmem:[%s7 + $0x28] sm:$0xff] %v1009
  %1033 = vst [vmem:[%s7 + $0x30] sm:$0xff] %v1014
  %1034 = vst [vmem:[%s7 + $0x38] sm:$0xff] %v1019
  %1035 = vst [vmem:[%s7 + $0x40] sm:$0xff] %v1024
  // Predicated region
  $region30: #{decoder_rnn_forward.1} parent=0 // pred_check
    _
  $region31: #{decoder_rnn_forward.1} parent=0 // pred_check_branch
    %1037 = sbr.rel (0) target = $region33
  $region32: #{decoder_rnn_forward.1} parent=0 // pred_region
    _
  $region33: #{decoder_rnn_forward.1} parent=0 // pred_fallthru
    _
  // Predicated region
  $region34: #{decoder_rnn_forward.1} parent=0 // pred_check
    _
  $region35: #{decoder_rnn_forward.1} parent=0 // pred_check_branch
    %1039 = sbr.rel (0) target = $region37
  $region36: #{decoder_rnn_forward.1} parent=0 // pred_region
    _
  $region37: #{decoder_rnn_forward.1} parent=0 // pred_fallthru
    _

</llo_original>
